<compile_context>
chip_gen: v6e
topology: v6e:2x2x1
jax: 0.10.0
libtpu: 0.0.40
codegen_flags: <defaults>
</compile_context>

<pallas_src>
import jax
import jax.numpy as jnp
from jax.experimental import pallas as pl
from jax.experimental.pallas import tpu as pltpu


def _split_kernel(pod_rank: int):
    """Kernel writing x[:, pod_rank:] -> main and x[:, :pod_rank] -> outlier."""

    def kernel(x_ref, main_ref, outlier_ref):
        # Slice the Ref directly (static lane slices): one load + one store per
        # output window, no full-tile value materialization.
        main_ref[...] = x_ref[:, pod_rank:]
        outlier_ref[...] = x_ref[:, :pod_rank]

    return kernel


def _vmem_budget_bytes() -> int:
    """~75% of physical VMEM (v7x: ~48 MiB, v5e/v6e: ~96 MiB)."""
    try:
        cap = int(pltpu.get_tpu_info().vmem_capacity_bytes)
    except Exception:
        cap = 128 << 20
    return int(cap * 3) // 4


def _choose_row_tile(rows: int, hidden: int, itemsize: int, vmem_budget: int) -> int:
    """Pick a row-tile size: big tiles to amortize grid-step overhead, but keep
    the double-buffered (input + both output) tiles well inside the budget."""
    # ~16 MiB input tiles on 128-MiB-VMEM parts (v5e/v6e), ~10 MiB on v7x.
    target_tile_bytes = (16 << 20) if vmem_budget > (64 << 20) else (10 << 20)
    tm = max(1, target_tile_bytes // max(1, hidden * itemsize))

    # Double-buffered input + outputs ~= 2 * (hidden + hidden) bytes per row.
    per_row_pipelined = 4 * hidden * itemsize
    tm_budget = max(1, (vmem_budget * 3 // 4) // max(1, per_row_pipelined))
    tm = min(tm, tm_budget)

    # Dtype-aware sublane multiple: 8 (f32), 16 (bf16/f16), 32 (int8/fp8).
    sub = max(8, 32 // max(1, itemsize))
    tm = (tm // sub) * sub
    tm = max(sub, min(tm, 8192))

    if rows <= tm:
        # Full-extent block is always legal (and exact) for small inputs.
        return rows
    return tm


def identity_forward(x, pod_rank: int, *, use_pallas: bool = False):
    """Pallas/JAX equivalent of Identity.forward.

    Args:
      x: jnp array of shape [..., hidden]
      pod_rank: number of leading "outlier" channels to split off.
      use_pallas: if True, run the standalone Pallas split kernel; otherwise
        use plain jnp slicing (preferred: fuses into neighboring ops).

    Returns:
      (main_x, outlier_x); outlier_x is None when pod_rank == 0.
    """
    if pod_rank == 0:
        # Pure no-op: no kernel, no copy.
        return x, None

    hidden = x.shape[-1]
    main_dim = hidden - pod_rank

    if not use_pallas or main_dim <= 0:
        # Recommended path: let XLA fuse the slices into producer/consumer ops.
        return x[..., pod_rank:], x[..., :pod_rank]

    lead_shape = x.shape[:-1]
    rows = 1
    for d in lead_shape:
        rows *= d
    x2d = x.reshape(rows, hidden)

    itemsize = jnp.dtype(x.dtype).itemsize
    vmem_budget = _vmem_budget_bytes()
    tm = _choose_row_tile(rows, hidden, itemsize, vmem_budget)
    grid = (pl.cdiv(rows, tm),)

    # Double-buffered input tile + both output tiles, plus headroom; never
    # above the generation-aware budget (keeps v7x's 64 MiB part safe).
    need = 2 * tm * (hidden + main_dim + pod_rank) * itemsize + (2 << 20)
    vmem_bytes = int(min(max(need, 8 << 20), vmem_budget))

    main, outlier = pl.pallas_call(
        _split_kernel(pod_rank),
        out_shape=(
            jax.ShapeDtypeStruct((rows, main_dim), x.dtype),
            jax.ShapeDtypeStruct((rows, pod_rank), x.dtype),
        ),
        grid_spec=pltpu.PrefetchScalarGridSpec(
            num_scalar_prefetch=0,
            grid=grid,
            in_specs=[pl.BlockSpec((tm, hidden), lambda i: (i, 0))],
            out_specs=[
                pl.BlockSpec((tm, main_dim), lambda i: (i, 0)),
                pl.BlockSpec((tm, pod_rank), lambda i: (i, 0)),
            ],
        ),
        compiler_params=pltpu.CompilerParams(
            # "parallel" lets v7x shard the row axis across both TensorCores.
            dimension_semantics=("parallel",),
            vmem_limit_bytes=vmem_bytes,
        ),
    )(x2d)

    return (
        main.reshape(*lead_shape, main_dim),
        outlier.reshape(*lead_shape, pod_rank),
    )


if __name__ == "__main__":
    key = jax.random.PRNGKey(0)
    batch, seq, hidden = 2, 8, 32
    pod_rank = 8

    x = jax.random.normal(key, (batch, seq, hidden), dtype=jnp.float32)

    # Case 1: pod_rank > 0, standalone Pallas kernel path.
    main, outlier = identity_forward(x, pod_rank, use_pallas=True)
    jax.block_until_ready(main)
    jax.block_until_ready(outlier)
    assert main.shape == (batch, seq, hidden - pod_rank)
    assert outlier.shape == (batch, seq, pod_rank)
    assert jnp.array_equal(main, x[..., pod_rank:])
    assert jnp.array_equal(outlier, x[..., :pod_rank])

    # Case 2: pod_rank > 0, default (fused jnp slicing) path.
    main_f, outlier_f = identity_forward(x, pod_rank)
    jax.block_until_ready(main_f)
    jax.block_until_ready(outlier_f)
    assert jnp.array_equal(main_f, x[..., pod_rank:])
    assert jnp.array_equal(outlier_f, x[..., :pod_rank])

    # Case 3: pod_rank == 0 -> identity, outlier is None (no kernel launched).
    main0, outlier0 = identity_forward(x, 0)
    jax.block_until_ready(main0)
    assert outlier0 is None
    assert jnp.array_equal(main0, x)

    print("KERNEL_OK")
</pallas_src>

<mosaic_0001>
module attributes {stable_mosaic.version = 11 : i64} {
  func.func @kernel(%arg0: i32, %arg1: memref<16x32xf32, #tpu.memory_space<vmem>>, %arg2: memref<16x24xf32, #tpu.memory_space<vmem>>, %arg3: memref<16x8xf32, #tpu.memory_space<vmem>>) attributes {dimension_semantics = [#tpu.dimension_semantics<parallel>], iteration_bounds = array<i64: 1>, scalar_prefetch = 0 : i64, scratch_operands = 0 : i64, tpu.core_type = #tpu.core_type<tc>, window_params = [{transform_indices = @transform_0, window_bounds = array<i64: 16, 32>}, {transform_indices = @transform_1, window_bounds = array<i64: 16, 24>}, {transform_indices = @transform_2, window_bounds = array<i64: 16, 8>}]} {
    %c0 = arith.constant 0 : index
    %c8 = arith.constant 8 : index
    %0 = vector.load %arg1[%c0, %c8] : memref<16x32xf32, #tpu.memory_space<vmem>>, vector<16x24xf32>
    %c0_0 = arith.constant 0 : index
    %c0_1 = arith.constant 0 : index
    %1 = vector.load %arg2[%c0_0, %c0_1] : memref<16x24xf32, #tpu.memory_space<vmem>>, vector<16x24xf32>
    tpu.vector_store %arg2[%c0_0, %c0_1], %0 {strides = array<i32>} : memref<16x24xf32, #tpu.memory_space<vmem>>, vector<16x24xf32>,
    %c0_2 = arith.constant 0 : index
    %c0_3 = arith.constant 0 : index
    %2 = vector.load %arg1[%c0_2, %c0_3] : memref<16x32xf32, #tpu.memory_space<vmem>>, vector<16x8xf32>
    %c0_4 = arith.constant 0 : index
    %c0_5 = arith.constant 0 : index
    %3 = vector.load %arg3[%c0_4, %c0_5] : memref<16x8xf32, #tpu.memory_space<vmem>>, vector<16x8xf32>
    tpu.vector_store %arg3[%c0_4, %c0_5], %2 {strides = array<i32>} : memref<16x8xf32, #tpu.memory_space<vmem>>, vector<16x8xf32>,
    return
  }
  func.func @transform_0(%arg0: i32) -> (i32, i32) {
    %c0_i32 = arith.constant 0 : i32
    %c0_i32_0 = arith.constant 0 : i32
    return %arg0, %c0_i32 : i32, i32
  }
  func.func @transform_1(%arg0: i32) -> (i32, i32) {
    %c0_i32 = arith.constant 0 : i32
    %c0_i32_0 = arith.constant 0 : i32
    return %arg0, %c0_i32 : i32, i32
  }
  func.func @transform_2(%arg0: i32) -> (i32, i32) {
    %c0_i32 = arith.constant 0 : i32
    %c0_i32_0 = arith.constant 0 : i32
    return %arg0, %c0_i32 : i32, i32
  }
}

</mosaic_0001>

<llo_original>
// kernel: tpu_custom_call.1
$region0: #{tpu_custom_call.1}
  #allocation0 [shape = 'u32[]', space=smem, size = 0x4, offset = 0x4, fixed_abs, tag = 'smem constant byte address 0x4 - core index']
  #allocation1 [shape = 'u32[144,128]{1,0:T(1,128)}', space=vmem, size = 0x12000, scoped, tag = 'internal scratch']
  %s0 = inlined_call_operand.hbm [shape: f32[16,32], index: 0, kind: input, shape index: {}]
  %s1 = inlined_call_operand.hbm [shape: f32[16,24], index: 1, kind: output, shape index: {0}]
  %s2 = inlined_call_operand.vmem [shape: f32[16,8], index: 2, kind: output, shape index: {1}]
  %3 = xla_tuple %s1, %s2
  %s4 = sld [smem:[#allocation0]]
  $region26: #{tpu_custom_call.1} parent=0
    _
  %s6 = ssub.s32 1, %s4
  %s7 = scalar_select 0, %s6, %s4
  $region1: #{tpu_custom_call.1} parent=0
    #allocation2 [shape = 'u8[8192]{0}', space=vmem, size = 0x2000, scoped, tag = 'input window, operand 0, single buffered']
    #allocation3 [shape = 's32[1]{0}', space=sflag, size = 0x4, scoped, tag = 'scoped memory for tpu_custom_call.1']
    #allocation4 [shape = 's32[1]{0}', space=sflag, size = 0x4, scoped, tag = 'scoped memory for tpu_custom_call.1']
    #allocation5 [shape = 'u8[8192]{0}', space=vmem, size = 0x2000, scoped, tag = 'output window, operand 0, single buffered']
    %8 = vsyncpa [#allocation3], 0
    %9 = vsyncpa [#allocation4], 0
    // Predicated region
    $region2: #{tpu_custom_call.1} parent=1 // pred_check
      _
    $region3: #{tpu_custom_call.1} parent=1 // pred_check_branch
      %11 = sbr.rel (0) target = $region5
    $region4: #{tpu_custom_call.1} parent=1 // pred_region
      %s13 = ssub.s32 256, 256
      %14 = vsyncadd [#allocation3], %s13
      %s15 = sshll.u32 [#allocation2], 4
      %s16 = int_to_ptr.vmem [resolvable:$true] %s15
      %21 = dma.hbm_to_vmem [thread:$0]  %s0, 256, %s16, [#allocation3], 128, 128, 8
    $region5: #{tpu_custom_call.1} parent=1 // pred_fallthru
      _
    // Predicated region
    $region6: #{tpu_custom_call.1} parent=1 // pred_check
      _
    $region7: #{tpu_custom_call.1} parent=1 // pred_check_branch
      %23 = sbr.rel (0) target = $region9
    $region8: #{tpu_custom_call.1} parent=1 // pred_region
      %24 = dma.done [#allocation3], 256
    $region9: #{tpu_custom_call.1} parent=1 // pred_fallthru
      _
    %v25 = vld [vmem:[#allocation2] sm:$0xff]
    %v26 = vld [vmem:[#allocation2 + $0x8] sm:$0xff]
    %29 = vrot.lane.b32.xlu0 %v25, 120
    %v30 = vpop.permute.xlu0 %29
    %31 = vrot.lane.b32.xlu0 %v26, 120
    %v32 = vpop.permute.xlu0 %31
    %vm35 = vcmask 195584
    %36 = vst.msk [vmem:[#allocation5] sm:$0xff] %vm35, %v30
    %37 = vst.msk [vmem:[#allocation5 + $0x8] sm:$0xff] %vm35, %v32
    %v38 = vld [vmem:[#allocation2] sm:$0xff]
    %v39 = vld [vmem:[#allocation2 + $0x8] sm:$0xff]
    %vm40 = vcmask 64512
    %41 = vst.msk [vmem:[%s2] sm:$0xff] %vm40, %v38
    %42 = vst.msk [vmem:[%s2 + $0x8] sm:$0xff] %vm40, %v39
    // Predicated region
    $region10: #{tpu_custom_call.1} parent=1 // pred_check
      _
    $region11: #{tpu_custom_call.1} parent=1 // pred_check_branch
      %44 = sbr.rel (0) target = $region13
    $region12: #{tpu_custom_call.1} parent=1 // pred_region
      %s46 = ssub.s32 256, 256
      %47 = vsyncadd [#allocation4], %s46
      %s48 = sshll.u32 [#allocation5], 4
      %s49 = int_to_ptr.vmem [resolvable:$true] %s48
      %54 = dma.vmem_to_hbm [thread:$0]  %s49, 256, %s1, [#allocation4], 128, 128, 8
    $region13: #{tpu_custom_call.1} parent=1 // pred_fallthru
      _
    // Predicated region
    $region14: #{tpu_custom_call.1} parent=1 // pred_check
      _
    $region15: #{tpu_custom_call.1} parent=1 // pred_check_branch
      %56 = sbr.rel (0) target = $region17
    $region16: #{tpu_custom_call.1} parent=1 // pred_region
      _
    $region17: #{tpu_custom_call.1} parent=1 // pred_fallthru
      _
    // Predicated region
    $region18: #{tpu_custom_call.1} parent=1 // pred_check
      _
    $region19: #{tpu_custom_call.1} parent=1 // pred_check_branch
      %58 = sbr.rel (0) target = $region21
    $region20: #{tpu_custom_call.1} parent=1 // pred_region
      %59 = dma.done [#allocation4], 256
    $region21: #{tpu_custom_call.1} parent=1 // pred_fallthru
      _
    // Predicated region
    $region22: #{tpu_custom_call.1} parent=1 // pred_check
      _
    $region23: #{tpu_custom_call.1} parent=1 // pred_check_branch
      %61 = sbr.rel (0) target = $region25
    $region24: #{tpu_custom_call.1} parent=1 // pred_region
      _
    $region25: #{tpu_custom_call.1} parent=1 // pred_fallthru
      _
    %62 = vsyncpa [#allocation3], 1
    %63 = vsyncpa [#allocation4], 1

</llo_original>
